<compile_context>
chip_gen: v7x
topology: tpu7x:2x2x1
jax: 0.10.0
libtpu: 0.0.40
codegen_flags: <defaults>
</compile_context>

<pallas_src>
import functools

import jax
import jax.numpy as jnp
from jax.experimental import pallas as pl
from jax.experimental.pallas import tpu as pltpu

NUM_CLASSES = 10
HIDDEN = 64
PROJ_DIM = 32
TAIL_N = PROJ_DIM + 2 * NUM_CLASSES      # 52
C1 = 16                                  # conv1 out channels
C2 = 32                                  # conv2 out channels
OUT_LANES = 128                          # [h(64) | z(32) | l0(10) | l1(10) | pad(12)]


# ---------------------------------------------------------------------------
# Single fused kernel (one image per grid step):
#   conv1+ReLU+pool -> conv2+ReLU -> pool+fc1+ReLU -> [proj|head0|head1]
# ---------------------------------------------------------------------------
def _fused_net_kernel(p1_ref, w1_ref, b1_ref, w2_ref, b2_ref,
                      wf_ref, bf_ref, wt_ref, bt_ref, out_ref):
    f32 = jnp.float32

    # ---- conv1 (3x3, stride 2, pad 1) + ReLU + 2x2 max-pool: one MXU matmul
    # p1_ref[0]: (64, 27) im2col patches; rows ordered (phase(di,dj), ph, pw),
    # columns ordered (ki, kj, cin) to match w1 (HWIO flatten).
    p1 = p1_ref[0]                                                 # (64, 27)
    y1 = jnp.dot(p1, w1_ref[...], preferred_element_type=f32)      # (64, 16)
    # 2x2 pool == max over the 4 stride-phase row blocks (bias/ReLU commute).
    m = jnp.maximum(jnp.maximum(y1[0:16], y1[16:32]),
                    jnp.maximum(y1[32:48], y1[48:64]))             # (16, 16)
    pool1 = jnp.maximum(m + b1_ref[...], 0.0)                      # rows = (i, j)

    # ---- conv2 (3x3, stride 1, pad 1) + ReLU: in-register im2col + matmul --
    z1 = jnp.zeros((1, C1), f32)
    z4 = jnp.zeros((4, C1), f32)
    # j-shifted copies (shift within each 4-row i-block, zero-filled edges).
    s_m1 = jnp.concatenate(
        [piece for i in range(4) for piece in (z1, pool1[4 * i:4 * i + 3])], axis=0)
    s_p1 = jnp.concatenate(
        [piece for i in range(4) for piece in (pool1[4 * i + 1:4 * i + 4], z1)], axis=0)
    shifted_j = {-1: s_m1, 0: pool1, 1: s_p1}

    taps = []
    for ki in range(3):
        di = ki - 1
        for kj in range(3):
            sj = shifted_j[kj - 1]
            if di == 0:
                tap = sj                                            # (16, 16)
            elif di == 1:
                tap = jnp.concatenate([sj[4:16], z4], axis=0)
            else:
                tap = jnp.concatenate([z4, sj[0:12]], axis=0)
            taps.append(tap)
    patch2 = jnp.concatenate(taps, axis=1)                          # (16, 144)

    y2 = jnp.dot(patch2, w2_ref[...], preferred_element_type=f32)   # (16, 32)
    y2 = jnp.maximum(y2 + b2_ref[...], 0.0)                         # rows = (i, j)

    # ---- 2x2 max-pool + fc1 (+ReLU): one K=128 matmul -----------------------
    pooled = []
    for ph in range(2):
        for pw in range(2):
            r0 = 8 * ph + 2 * pw
            p = jnp.maximum(
                jnp.maximum(y2[r0:r0 + 1], y2[r0 + 1:r0 + 2]),
                jnp.maximum(y2[r0 + 4:r0 + 5], y2[r0 + 5:r0 + 6]))  # (1, 32)
            pooled.append(p)
    pfc = jnp.concatenate(pooled, axis=1)                           # (1, 128)
    h = jnp.dot(pfc, wf_ref[...], preferred_element_type=f32)
    h = jnp.maximum(h + bf_ref[...], 0.0)                           # (1, 64)

    # ---- fused tail: [proj | head0 | head1] in one (64, 52) matmul ----------
    tail = jnp.dot(h, wt_ref[...], preferred_element_type=f32) + bt_ref[...]  # (1, 52)

    # ---- single lane-dense store --------------------------------------------
    pad = jnp.zeros((1, OUT_LANES - HIDDEN - TAIL_N), f32)
    out_ref[0] = jnp.concatenate([h, tail, pad], axis=1)            # (1, 128)


def _fused_forward(p1, w1, b1, w2, b2, wf, bf, wt, bt):
    B = p1.shape[0]
    grid_spec = pltpu.PrefetchScalarGridSpec(
        num_scalar_prefetch=0,
        grid=(B,),
        in_specs=[
            pl.BlockSpec((1, 64, 27), lambda b: (b, 0, 0)),      # conv1 patches
            pl.BlockSpec((27, C1), lambda b: (0, 0)),            # w1
            pl.BlockSpec((1, C1), lambda b: (0, 0)),             # b1
            pl.BlockSpec((9 * C1, C2), lambda b: (0, 0)),        # w2
            pl.BlockSpec((1, C2), lambda b: (0, 0)),             # b2
            pl.BlockSpec((4 * C2, HIDDEN), lambda b: (0, 0)),    # wf
            pl.BlockSpec((1, HIDDEN), lambda b: (0, 0)),         # bf
            pl.BlockSpec((HIDDEN, TAIL_N), lambda b: (0, 0)),    # wt
            pl.BlockSpec((1, TAIL_N), lambda b: (0, 0)),         # bt
        ],
        out_specs=pl.BlockSpec((1, 1, OUT_LANES), lambda b: (b, 0, 0)),
    )
    return pl.pallas_call(
        _fused_net_kernel,
        out_shape=jax.ShapeDtypeStruct((B, 1, OUT_LANES), jnp.float32),
        grid_spec=grid_spec,
        compiler_params=pltpu.CompilerParams(
            dimension_semantics=("parallel",)),      # 2x on v7x, free on v5e/v6e
    )(p1, w1, b1, w2, b2, wf, bf, wt, bt)


# ---------------------------------------------------------------------------
# Deterministic parameters for the small AlexNet-SimCLR-HN stand-in
# ---------------------------------------------------------------------------
def init_params(key):
    ks = jax.random.split(key, 6)

    def w(k, shape, fan_in):
        return jax.random.normal(k, shape, jnp.float32) / jnp.sqrt(fan_in)

    return {
        "conv1_w": w(ks[0], (3, 3, 3, C1), 3 * 3 * 3),          # HWIO
        "conv1_b": jnp.zeros((C1,), jnp.float32),
        "conv2_w": w(ks[1], (3, 3, C1, C2), 3 * 3 * C1),        # HWIO
        "conv2_b": jnp.zeros((C2,), jnp.float32),
        "fc1_w":   w(ks[2], (C2 * 2 * 2, HIDDEN), C2 * 2 * 2),  # NCHW-flatten rows
        "fc1_b":   jnp.zeros((HIDDEN,), jnp.float32),
        "proj_w":  w(ks[3], (HIDDEN, PROJ_DIM), HIDDEN),
        "proj_b":  jnp.zeros((PROJ_DIM,), jnp.float32),
        "head0_w": w(ks[4], (HIDDEN, NUM_CLASSES), HIDDEN),
        "head0_b": jnp.zeros((NUM_CLASSES,), jnp.float32),
        "head1_w": w(ks[5], (HIDDEN, NUM_CLASSES), HIDDEN),
        "head1_b": jnp.zeros((NUM_CLASSES,), jnp.float32),
    }


# ---------------------------------------------------------------------------
# Inner model + Wrapper forward semantics
# ---------------------------------------------------------------------------
def model_forward(params, x_nchw):
    """Returns (features, list_outputs, logits_list) like the SimCLR-HN model."""
    B, C, H, W = x_nchw.shape
    assert (C, H, W) == (3, 16, 16), "stand-in backbone is specialized to 3x16x16 inputs"

    # Host-side im2col for conv1 (B*64*27 floats; ~14 KB at B=2). Rows are
    # ordered (stride-phase di,dj; pooled row ph; pooled col pw) so the kernel
    # fuses the 2x2 pool as a max over four 16-row blocks; columns (ki,kj,cin).
    xp = jnp.pad(x_nchw, ((0, 0), (0, 0), (1, 1), (1, 1)))               # (B,3,18,18)
    pt = jnp.stack([xp[:, :, ki:ki + 16:2, kj:kj + 16:2]
                    for ki in range(3) for kj in range(3)], axis=-1)     # (B,3,8,8,9)
    pt = pt.reshape(B, 3, 4, 2, 4, 2, 9)                                 # (b,c,ph,di,pw,dj,kk)
    p1 = pt.transpose(0, 3, 5, 2, 4, 6, 1).reshape(B, 64, 27)

    w1 = params["conv1_w"].reshape(27, C1)
    w2 = params["conv2_w"].reshape(9 * C1, C2)
    # fc1_w is defined against a PyTorch-style NCHW flatten (c*4 + ph*2 + pw);
    # reorder rows to (ph, pw, c) to match the kernel's lane-concat of pooled maps.
    wf = params["fc1_w"].reshape(C2, 2, 2, HIDDEN).transpose(1, 2, 0, 3).reshape(4 * C2, HIDDEN)
    # Fuse proj/head0/head1 (shared LHS h) into one lane-wider matmul.
    wt = jnp.concatenate([params["proj_w"], params["head0_w"], params["head1_w"]], axis=1)
    bt = jnp.concatenate([params["proj_b"], params["head0_b"], params["head1_b"]])

    out = _fused_forward(
        p1,
        w1, params["conv1_b"].reshape(1, C1),
        w2, params["conv2_b"].reshape(1, C2),
        wf, params["fc1_b"].reshape(1, HIDDEN),
        wt, bt.reshape(1, TAIL_N))[:, 0, :]                              # (B, 128)

    h = out[:, :HIDDEN]
    z = out[:, HIDDEN:HIDDEN + PROJ_DIM]
    l0 = out[:, HIDDEN + PROJ_DIM:HIDDEN + PROJ_DIM + NUM_CLASSES]
    l1 = out[:, HIDDEN + PROJ_DIM + NUM_CLASSES:HIDDEN + TAIL_N]
    return h, [z], [l0, l1]


@functools.partial(jax.jit, static_argnames=("output_layer", "return_logits"))
def wrapper_forward(params, x, output_layer=0, return_logits=True):
    """Exact semantics of Wrapper.forward."""
    _, list_outputs, logits = model_forward(params, x)
    if return_logits:
        return logits if output_layer is None else logits[output_layer]
    return list_outputs if output_layer is None else list_outputs[output_layer]


# ---------------------------------------------------------------------------
if __name__ == "__main__":
    key = jax.random.PRNGKey(0)
    k_x, k_p = jax.random.split(key)
    x = jax.random.normal(k_x, (2, 3, 16, 16), jnp.float32)   # NCHW input
    params = init_params(k_p)

    out = wrapper_forward(params, x, output_layer=0, return_logits=True)
    out = jax.block_until_ready(out)

    assert out.shape == (2, NUM_CLASSES), out.shape
    assert out.dtype == jnp.float32
    assert bool(jnp.all(jnp.isfinite(out)))
    print("KERNEL_OK")
</pallas_src>

<mosaic_0001>
module attributes {stable_mosaic.version = 11 : i64} {
  func.func @_fused_net_kernel(%arg0: i32, %arg1: memref<1x64x27xf32, #tpu.memory_space<vmem>>, %arg2: memref<27x16xf32, #tpu.memory_space<vmem>>, %arg3: memref<1x16xf32, #tpu.memory_space<vmem>>, %arg4: memref<144x32xf32, #tpu.memory_space<vmem>>, %arg5: memref<1x32xf32, #tpu.memory_space<vmem>>, %arg6: memref<128x64xf32, #tpu.memory_space<vmem>>, %arg7: memref<1x64xf32, #tpu.memory_space<vmem>>, %arg8: memref<64x52xf32, #tpu.memory_space<vmem>>, %arg9: memref<1x52xf32, #tpu.memory_space<vmem>>, %arg10: memref<1x1x128xf32, #tpu.memory_space<vmem>>) attributes {dimension_semantics = [#tpu.dimension_semantics<parallel>], iteration_bounds = array<i64: 2>, scalar_prefetch = 0 : i64, scratch_operands = 0 : i64, tpu.core_type = #tpu.core_type<tc>, window_params = [{transform_indices = @transform_0, window_bounds = array<i64: 1, 64, 27>}, {pipeline_mode = #tpu.pipeline_mode<synchronous>, transform_indices = @transform_1, window_bounds = array<i64: 27, 16>}, {pipeline_mode = #tpu.pipeline_mode<synchronous>, transform_indices = @transform_2, window_bounds = array<i64: 1, 16>}, {pipeline_mode = #tpu.pipeline_mode<synchronous>, transform_indices = @transform_3, window_bounds = array<i64: 144, 32>}, {pipeline_mode = #tpu.pipeline_mode<synchronous>, transform_indices = @transform_4, window_bounds = array<i64: 1, 32>}, {pipeline_mode = #tpu.pipeline_mode<synchronous>, transform_indices = @transform_5, window_bounds = array<i64: 128, 64>}, {pipeline_mode = #tpu.pipeline_mode<synchronous>, transform_indices = @transform_6, window_bounds = array<i64: 1, 64>}, {pipeline_mode = #tpu.pipeline_mode<synchronous>, transform_indices = @transform_7, window_bounds = array<i64: 64, 52>}, {pipeline_mode = #tpu.pipeline_mode<synchronous>, transform_indices = @transform_8, window_bounds = array<i64: 1, 52>}, {transform_indices = @transform_9, window_bounds = array<i64: 1, 1, 128>}]} {
    %c0 = arith.constant 0 : index
    %c0_0 = arith.constant 0 : index
    %c0_1 = arith.constant 0 : index
    %0 = vector.load %arg1[%c0, %c0_0, %c0_1] : memref<1x64x27xf32, #tpu.memory_space<vmem>>, vector<1x64x27xf32>
    %1 = vector.shape_cast %0 : vector<1x64x27xf32> to vector<64x27xf32>
    %c0_2 = arith.constant 0 : index
    %c0_3 = arith.constant 0 : index
    %2 = vector.load %arg2[%c0_2, %c0_3] : memref<27x16xf32, #tpu.memory_space<vmem>>, vector<27x16xf32>
    %cst = arith.constant dense<0.000000e+00> : vector<64x16xf32>
    %3 = tpu.matmul %1, %2, %cst {dimension_numbers = #tpu.dot_dimension_numbers<[1], [0], [0], [1], [0, 0, 1, 1], [], []>} : vector<64x27xf32>, vector<27x16xf32>, vector<64x16xf32> -> vector<64x16xf32>
    %4 = vector.extract_strided_slice %3 {offsets = [0, 0], sizes = [16, 16], strides = [1, 1]} : vector<64x16xf32> to vector<16x16xf32>
    %5 = vector.extract_strided_slice %3 {offsets = [16, 0], sizes = [16, 16], strides = [1, 1]} : vector<64x16xf32> to vector<16x16xf32>
    %6 = arith.maximumf %4, %5 : vector<16x16xf32>
    %7 = vector.extract_strided_slice %3 {offsets = [32, 0], sizes = [16, 16], strides = [1, 1]} : vector<64x16xf32> to vector<16x16xf32>
    %8 = vector.extract_strided_slice %3 {offsets = [48, 0], sizes = [16, 16], strides = [1, 1]} : vector<64x16xf32> to vector<16x16xf32>
    %9 = arith.maximumf %7, %8 : vector<16x16xf32>
    %10 = arith.maximumf %6, %9 : vector<16x16xf32>
    %c0_4 = arith.constant 0 : index
    %c0_5 = arith.constant 0 : index
    %11 = vector.load %arg3[%c0_4, %c0_5] : memref<1x16xf32, #tpu.memory_space<vmem>>, vector<1x16xf32>
    %12 = vector.broadcast %11 : vector<1x16xf32> to vector<16x16xf32>
    %13 = arith.addf %10, %12 : vector<16x16xf32>
    %cst_6 = arith.constant 0.000000e+00 : f32
    %14 = vector.broadcast %cst_6 : f32 to vector<16x16xf32>
    %15 = arith.maximumf %13, %14 : vector<16x16xf32>
    %cst_7 = arith.constant 0.000000e+00 : f32
    %16 = vector.broadcast %cst_7 : f32 to vector<1x16xf32>
    %cst_8 = arith.constant 0.000000e+00 : f32
    %17 = vector.broadcast %cst_8 : f32 to vector<4x16xf32>
    %18 = vector.extract_strided_slice %15 {offsets = [0, 0], sizes = [3, 16], strides = [1, 1]} : vector<16x16xf32> to vector<3x16xf32>
    %19 = vector.extract_strided_slice %15 {offsets = [4, 0], sizes = [3, 16], strides = [1, 1]} : vector<16x16xf32> to vector<3x16xf32>
    %20 = vector.extract_strided_slice %15 {offsets = [8, 0], sizes = [3, 16], strides = [1, 1]} : vector<16x16xf32> to vector<3x16xf32>
    %21 = vector.extract_strided_slice %15 {offsets = [12, 0], sizes = [3, 16], strides = [1, 1]} : vector<16x16xf32> to vector<3x16xf32>
    %22 = tpu.concatenate %16, %18, %16, %19, %16, %20, %16, %21 in 0 : vector<1x16xf32>, vector<3x16xf32>, vector<1x16xf32>, vector<3x16xf32>, vector<1x16xf32>, vector<3x16xf32>, vector<1x16xf32>, vector<3x16xf32> -> vector<16x16xf32>
    %23 = vector.extract_strided_slice %15 {offsets = [1, 0], sizes = [3, 16], strides = [1, 1]} : vector<16x16xf32> to vector<3x16xf32>
    %24 = vector.extract_strided_slice %15 {offsets = [5, 0], sizes = [3, 16], strides = [1, 1]} : vector<16x16xf32> to vector<3x16xf32>
    %25 = vector.extract_strided_slice %15 {offsets = [9, 0], sizes = [3, 16], strides = [1, 1]} : vector<16x16xf32> to vector<3x16xf32>
    %26 = vector.extract_strided_slice %15 {offsets = [13, 0], sizes = [3, 16], strides = [1, 1]} : vector<16x16xf32> to vector<3x16xf32>
    %27 = tpu.concatenate %23, %16, %24, %16, %25, %16, %26, %16 in 0 : vector<3x16xf32>, vector<1x16xf32>, vector<3x16xf32>, vector<1x16xf32>, vector<3x16xf32>, vector<1x16xf32>, vector<3x16xf32>, vector<1x16xf32> -> vector<16x16xf32>
    %28 = vector.extract_strided_slice %22 {offsets = [0, 0], sizes = [12, 16], strides = [1, 1]} : vector<16x16xf32> to vector<12x16xf32>
    %29 = tpu.concatenate %17, %28 in 0 : vector<4x16xf32>, vector<12x16xf32> -> vector<16x16xf32>
    %30 = vector.extract_strided_slice %15 {offsets = [0, 0], sizes = [12, 16], strides = [1, 1]} : vector<16x16xf32> to vector<12x16xf32>
    %31 = tpu.concatenate %17, %30 in 0 : vector<4x16xf32>, vector<12x16xf32> -> vector<16x16xf32>
    %32 = vector.extract_strided_slice %27 {offsets = [0, 0], sizes = [12, 16], strides = [1, 1]} : vector<16x16xf32> to vector<12x16xf32>
    %33 = tpu.concatenate %17, %32 in 0 : vector<4x16xf32>, vector<12x16xf32> -> vector<16x16xf32>
    %34 = vector.extract_strided_slice %22 {offsets = [4, 0], sizes = [12, 16], strides = [1, 1]} : vector<16x16xf32> to vector<12x16xf32>
    %35 = tpu.concatenate %34, %17 in 0 : vector<12x16xf32>, vector<4x16xf32> -> vector<16x16xf32>
    %36 = vector.extract_strided_slice %15 {offsets = [4, 0], sizes = [12, 16], strides = [1, 1]} : vector<16x16xf32> to vector<12x16xf32>
    %37 = tpu.concatenate %36, %17 in 0 : vector<12x16xf32>, vector<4x16xf32> -> vector<16x16xf32>
    %38 = vector.extract_strided_slice %27 {offsets = [4, 0], sizes = [12, 16], strides = [1, 1]} : vector<16x16xf32> to vector<12x16xf32>
    %39 = tpu.concatenate %38, %17 in 0 : vector<12x16xf32>, vector<4x16xf32> -> vector<16x16xf32>
    %40 = tpu.concatenate %29, %31, %33, %22, %15, %27, %35, %37, %39 in 1 : vector<16x16xf32>, vector<16x16xf32>, vector<16x16xf32>, vector<16x16xf32>, vector<16x16xf32>, vector<16x16xf32>, vector<16x16xf32>, vector<16x16xf32>, vector<16x16xf32> -> vector<16x144xf32>
    %c0_9 = arith.constant 0 : index
    %c0_10 = arith.constant 0 : index
    %41 = vector.load %arg4[%c0_9, %c0_10] : memref<144x32xf32, #tpu.memory_space<vmem>>, vector<144x32xf32>
    %cst_11 = arith.constant dense<0.000000e+00> : vector<16x32xf32>
    %42 = tpu.matmul %40, %41, %cst_11 {dimension_numbers = #tpu.dot_dimension_numbers<[1], [0], [0], [1], [0, 0, 1, 1], [], []>} : vector<16x144xf32>, vector<144x32xf32>, vector<16x32xf32> -> vector<16x32xf32>
    %c0_12 = arith.constant 0 : index
    %c0_13 = arith.constant 0 : index
    %43 = vector.load %arg5[%c0_12, %c0_13] : memref<1x32xf32, #tpu.memory_space<vmem>>, vector<1x32xf32>
    %44 = vector.broadcast %43 : vector<1x32xf32> to vector<16x32xf32>
    %45 = arith.addf %42, %44 : vector<16x32xf32>
    %cst_14 = arith.constant 0.000000e+00 : f32
    %46 = vector.broadcast %cst_14 : f32 to vector<16x32xf32>
    %47 = arith.maximumf %45, %46 : vector<16x32xf32>
    %48 = vector.extract_strided_slice %47 {offsets = [0, 0], sizes = [1, 32], strides = [1, 1]} : vector<16x32xf32> to vector<1x32xf32>
    %49 = vector.extract_strided_slice %47 {offsets = [1, 0], sizes = [1, 32], strides = [1, 1]} : vector<16x32xf32> to vector<1x32xf32>
    %50 = arith.maximumf %48, %49 : vector<1x32xf32>
    %51 = vector.extract_strided_slice %47 {offsets = [4, 0], sizes = [1, 32], strides = [1, 1]} : vector<16x32xf32> to vector<1x32xf32>
    %52 = vector.extract_strided_slice %47 {offsets = [5, 0], sizes = [1, 32], strides = [1, 1]} : vector<16x32xf32> to vector<1x32xf32>
    %53 = arith.maximumf %51, %52 : vector<1x32xf32>
    %54 = arith.maximumf %50, %53 : vector<1x32xf32>
    %55 = vector.extract_strided_slice %47 {offsets = [2, 0], sizes = [1, 32], strides = [1, 1]} : vector<16x32xf32> to vector<1x32xf32>
    %56 = vector.extract_strided_slice %47 {offsets = [3, 0], sizes = [1, 32], strides = [1, 1]} : vector<16x32xf32> to vector<1x32xf32>
    %57 = arith.maximumf %55, %56 : vector<1x32xf32>
    %58 = vector.extract_strided_slice %47 {offsets = [6, 0], sizes = [1, 32], strides = [1, 1]} : vector<16x32xf32> to vector<1x32xf32>
    %59 = vector.extract_strided_slice %47 {offsets = [7, 0], sizes = [1, 32], strides = [1, 1]} : vector<16x32xf32> to vector<1x32xf32>
    %60 = arith.maximumf %58, %59 : vector<1x32xf32>
    %61 = arith.maximumf %57, %60 : vector<1x32xf32>
    %62 = vector.extract_strided_slice %47 {offsets = [8, 0], sizes = [1, 32], strides = [1, 1]} : vector<16x32xf32> to vector<1x32xf32>
    %63 = vector.extract_strided_slice %47 {offsets = [9, 0], sizes = [1, 32], strides = [1, 1]} : vector<16x32xf32> to vector<1x32xf32>
    %64 = arith.maximumf %62, %63 : vector<1x32xf32>
    %65 = vector.extract_strided_slice %47 {offsets = [12, 0], sizes = [1, 32], strides = [1, 1]} : vector<16x32xf32> to vector<1x32xf32>
    %66 = vector.extract_strided_slice %47 {offsets = [13, 0], sizes = [1, 32], strides = [1, 1]} : vector<16x32xf32> to vector<1x32xf32>
    %67 = arith.maximumf %65, %66 : vector<1x32xf32>
    %68 = arith.maximumf %64, %67 : vector<1x32xf32>
    %69 = vector.extract_strided_slice %47 {offsets = [10, 0], sizes = [1, 32], strides = [1, 1]} : vector<16x32xf32> to vector<1x32xf32>
    %70 = vector.extract_strided_slice %47 {offsets = [11, 0], sizes = [1, 32], strides = [1, 1]} : vector<16x32xf32> to vector<1x32xf32>
    %71 = arith.maximumf %69, %70 : vector<1x32xf32>
    %72 = vector.extract_strided_slice %47 {offsets = [14, 0], sizes = [1, 32], strides = [1, 1]} : vector<16x32xf32> to vector<1x32xf32>
    %73 = vector.extract_strided_slice %47 {offsets = [15, 0], sizes = [1, 32], strides = [1, 1]} : vector<16x32xf32> to vector<1x32xf32>
    %74 = arith.maximumf %72, %73 : vector<1x32xf32>
    %75 = arith.maximumf %71, %74 : vector<1x32xf32>
    %76 = tpu.concatenate %54, %61, %68, %75 in 1 : vector<1x32xf32>, vector<1x32xf32>, vector<1x32xf32>, vector<1x32xf32> -> vector<1x128xf32>
    %c0_15 = arith.constant 0 : index
    %c0_16 = arith.constant 0 : index
    %77 = vector.load %arg6[%c0_15, %c0_16] : memref<128x64xf32, #tpu.memory_space<vmem>>, vector<128x64xf32>
    %cst_17 = arith.constant dense<0.000000e+00> : vector<1x64xf32>
    %78 = tpu.matmul %76, %77, %cst_17 {dimension_numbers = #tpu.dot_dimension_numbers<[1], [0], [0], [1], [0, 0, 1, 1], [], []>} : vector<1x128xf32>, vector<128x64xf32>, vector<1x64xf32> -> vector<1x64xf32>
    %c0_18 = arith.constant 0 : index
    %c0_19 = arith.constant 0 : index
    %79 = vector.load %arg7[%c0_18, %c0_19] : memref<1x64xf32, #tpu.memory_space<vmem>>, vector<1x64xf32>
    %80 = arith.addf %78, %79 : vector<1x64xf32>
    %cst_20 = arith.constant 0.000000e+00 : f32
    %81 = vector.broadcast %cst_20 : f32 to vector<1x64xf32>
    %82 = arith.maximumf %80, %81 : vector<1x64xf32>
    %c0_21 = arith.constant 0 : index
    %c0_22 = arith.constant 0 : index
    %83 = vector.load %arg8[%c0_21, %c0_22] : memref<64x52xf32, #tpu.memory_space<vmem>>, vector<64x52xf32>
    %cst_23 = arith.constant dense<0.000000e+00> : vector<1x52xf32>
    %84 = tpu.matmul %82, %83, %cst_23 {dimension_numbers = #tpu.dot_dimension_numbers<[1], [0], [0], [1], [0, 0, 1, 1], [], []>} : vector<1x64xf32>, vector<64x52xf32>, vector<1x52xf32> -> vector<1x52xf32>
    %c0_24 = arith.constant 0 : index
    %c0_25 = arith.constant 0 : index
    %85 = vector.load %arg9[%c0_24, %c0_25] : memref<1x52xf32, #tpu.memory_space<vmem>>, vector<1x52xf32>
    %86 = arith.addf %84, %85 : vector<1x52xf32>
    %cst_26 = arith.constant 0.000000e+00 : f32
    %87 = vector.broadcast %cst_26 : f32 to vector<1x12xf32>
    %88 = tpu.concatenate %82, %86, %87 in 1 : vector<1x64xf32>, vector<1x52xf32>, vector<1x12xf32> -> vector<1x128xf32>
    %c0_27 = arith.constant 0 : index
    %c0_28 = arith.constant 0 : index
    %c0_29 = arith.constant 0 : index
    %89 = vector.load %arg10[%c0_27, %c0_28, %c0_29] : memref<1x1x128xf32, #tpu.memory_space<vmem>>, vector<1x1x128xf32>
    %90 = vector.shape_cast %89 : vector<1x1x128xf32> to vector<1x128xf32>
    %91 = vector.shape_cast %88 : vector<1x128xf32> to vector<1x1x128xf32>
    tpu.vector_store %arg10[%c0_27, %c0_28, %c0_29], %91 {strides = array<i32>} : memref<1x1x128xf32, #tpu.memory_space<vmem>>, vector<1x1x128xf32>,
    return
  }
  func.func @transform_0(%arg0: i32) -> (i32, i32, i32) {
    %c0_i32 = arith.constant 0 : i32
    %c0_i32_0 = arith.constant 0 : i32
    %c0_i32_1 = arith.constant 0 : i32
    return %arg0, %c0_i32, %c0_i32_0 : i32, i32, i32
  }
  func.func @transform_1(%arg0: i32) -> (i32, i32) {
    %c0_i32 = arith.constant 0 : i32
    %c0_i32_0 = arith.constant 0 : i32
    %c0_i32_1 = arith.constant 0 : i32
    return %c0_i32, %c0_i32_0 : i32, i32
  }
  func.func @transform_2(%arg0: i32) -> (i32, i32) {
    %c0_i32 = arith.constant 0 : i32
    %c0_i32_0 = arith.constant 0 : i32
    %c0_i32_1 = arith.constant 0 : i32
    return %c0_i32, %c0_i32_0 : i32, i32
  }
  func.func @transform_3(%arg0: i32) -> (i32, i32) {
    %c0_i32 = arith.constant 0 : i32
    %c0_i32_0 = arith.constant 0 : i32
    %c0_i32_1 = arith.constant 0 : i32
    return %c0_i32, %c0_i32_0 : i32, i32
  }
  func.func @transform_4(%arg0: i32) -> (i32, i32) {
    %c0_i32 = arith.constant 0 : i32
    %c0_i32_0 = arith.constant 0 : i32
    %c0_i32_1 = arith.constant 0 : i32
    return %c0_i32, %c0_i32_0 : i32, i32
  }
  func.func @transform_5(%arg0: i32) -> (i32, i32) {
    %c0_i32 = arith.constant 0 : i32
    %c0_i32_0 = arith.constant 0 : i32
    %c0_i32_1 = arith.constant 0 : i32
    return %c0_i32, %c0_i32_0 : i32, i32
  }
  func.func @transform_6(%arg0: i32) -> (i32, i32) {
    %c0_i32 = arith.constant 0 : i32
    %c0_i32_0 = arith.constant 0 : i32
    %c0_i32_1 = arith.constant 0 : i32
    return %c0_i32, %c0_i32_0 : i32, i32
  }
  func.func @transform_7(%arg0: i32) -> (i32, i32) {
    %c0_i32 = arith.constant 0 : i32
    %c0_i32_0 = arith.constant 0 : i32
    %c0_i32_1 = arith.constant 0 : i32
    return %c0_i32, %c0_i32_0 : i32, i32
  }
  func.func @transform_8(%arg0: i32) -> (i32, i32) {
    %c0_i32 = arith.constant 0 : i32
    %c0_i32_0 = arith.constant 0 : i32
    %c0_i32_1 = arith.constant 0 : i32
    return %c0_i32, %c0_i32_0 : i32, i32
  }
  func.func @transform_9(%arg0: i32) -> (i32, i32, i32) {
    %c0_i32 = arith.constant 0 : i32
    %c0_i32_0 = arith.constant 0 : i32
    %c0_i32_1 = arith.constant 0 : i32
    return %arg0, %c0_i32, %c0_i32_0 : i32, i32, i32
  }
}

</mosaic_0001>

<llo_original>
// kernel: wrapper_forward.1
$region0: #{wrapper_forward.1}
  #allocation0 [shape = 'u32[]', space=smem, size = 0x4, offset = 0x4, fixed_abs, tag = 'smem constant byte address 0x4 - core index']
  #allocation1 [shape = 'u32[144,128]{1,0:T(1,128)}', space=vmem, size = 0x12000, scoped, tag = 'internal scratch']
  %s0 = inlined_call_operand.vmem [shape: f32[2,64,27], index: 0, kind: input, shape index: {}]
  %s1 = inlined_call_operand.vmem [shape: f32[27,16], index: 1, kind: input, shape index: {}]
  %s2 = inlined_call_operand.vmem [shape: f32[1,16], index: 2, kind: input, shape index: {}]
  %s3 = inlined_call_operand.vmem [shape: f32[144,32], index: 3, kind: input, shape index: {}]
  %s4 = inlined_call_operand.vmem [shape: f32[1,32], index: 4, kind: input, shape index: {}]
  %s5 = inlined_call_operand.vmem [shape: f32[128,64], index: 5, kind: input, shape index: {}]
  %s6 = inlined_call_operand.vmem [shape: f32[1,64], index: 6, kind: input, shape index: {}]
  %s7 = inlined_call_operand.vmem [shape: f32[64,52], index: 7, kind: input, shape index: {}]
  %s8 = inlined_call_operand.vmem [shape: f32[1,52], index: 8, kind: input, shape index: {}]
  %s9 = inlined_call_operand.vmem [shape: f32[2,1,128], index: 9, kind: output, shape index: {}]
  %s10 = sld [smem:[#allocation0]]
  $region69: #{wrapper_forward.1} parent=0
    _
  %s12 = ssub.s32 1, %s10
  %s13 = scalar_select 0, %s12, %s10
  loop: start=0, step=1, limit=4
  $region2: #{wrapper_forward.1} parent=0 // loop_pre_header
    _
  $region3: #{wrapper_forward.1} parent=0 // loop_header
    %s15 = sphi 0, %s19
    %p16 = scmp.ge.s32.totalorder %s15, 4
    %s25 = sphi 0, %s27
    %s28 = sphi 0, %s25
    %s29 = sphi 0, %s28
    %s45 = sphi 0, %s29
    %s49 = sphi 0, %s49
    %s51 = sphi 0, %s49
    %s52 = sphi 0, %s51
    %s66 = sphi 0, %s52
    %s70 = sphi 0, %s70
    %s72 = sphi 0, %s70
    %s73 = sphi 0, %s72
    %s87 = sphi 0, %s73
    %s91 = sphi 0, %s91
    %s93 = sphi 0, %s91
    %s94 = sphi 0, %s93
    %s108 = sphi 0, %s94
    %s112 = sphi 0, %s112
    %s114 = sphi 0, %s112
    %s115 = sphi 0, %s114
    %s129 = sphi 0, %s115
    %s133 = sphi 0, %s133
    %s135 = sphi 0, %s133
    %s136 = sphi 0, %s135
    %s150 = sphi 0, %s136
    %s154 = sphi 0, %s154
    %s156 = sphi 0, %s154
    %s157 = sphi 0, %s156
    %s171 = sphi 0, %s157
    %s175 = sphi 0, %s175
    %s177 = sphi 0, %s175
    %s178 = sphi 0, %s177
    %s192 = sphi 0, %s178
    %s196 = sphi 0, %s196
    %s198 = sphi 0, %s196
    %s199 = sphi 0, %s198
    %s213 = sphi 0, %s199
    %s219 = sphi 0, %s221
    %s222 = sphi 0, %s219
    %s223 = sphi 0, %s222
    %s239 = sphi 0, %s223
  $region4: #{wrapper_forward.1} parent=0 // loop_header_branch
    %18 = sbr.rel (%p16) target = $region8
  $region5: #{wrapper_forward.1} parent=0 // loop_body
    %s20 = ssub.s32 %s15, 1
    %s21 = ssub.s32 %s15, 2
    %s22 = sadd.s32 %s15, 1
    %s23 = ssub.s32 %s15, %s22
    %p24 = scmp.eq.s32.totalorder %s23, 0
    %s26 = sadd.s32 %s25, 1
    %s27 = scalar_select %p24, %s25, %s26
    %p30 = pneg %p24
    %p31 = scmp.eq.s32.totalorder %s15, 1
    %p32 = por %p30, %p31
    %p33 = scmp.ne.s32.totalorder %s25, %s28
    %p34 = scmp.eq.s32.totalorder %s15, 0
    %p35 = por %p33, %p34
    %p36 = scmp.ne.s32.totalorder %s25, %s28
    %p37 = scmp.eq.s32.totalorder %s20, 1
    %p38 = por %p36, %p37
    %p39 = scmp.ne.s32.totalorder %s28, %s29
    %p40 = scmp.eq.s32.totalorder %s20, 0
    %p41 = por %p39, %p40
    %p42 = scmp.ne.s32.totalorder %s28, %s29
    %p43 = scmp.eq.s32.totalorder %s21, 1
    %p44 = por %p42, %p43
    %p46 = scmp.ne.s32.totalorder %s29, %s45
    %p47 = scmp.eq.s32.totalorder %s21, 0
    %p48 = por %p46, %p47
    %s50 = sadd.s32 %s49, 1
    %p53 = scmp.eq.s32.totalorder %s15, 1
    %p54 = scmp.ne.s32.totalorder %s49, %s51
    %p55 = scmp.eq.s32.totalorder %s15, 0
    %p56 = por %p54, %p55
    %p57 = scmp.ne.s32.totalorder %s49, %s51
    %p58 = scmp.eq.s32.totalorder %s20, 1
    %p59 = por %p57, %p58
    %p60 = scmp.ne.s32.totalorder %s51, %s52
    %p61 = scmp.eq.s32.totalorder %s20, 0
    %p62 = por %p60, %p61
    %p63 = scmp.ne.s32.totalorder %s51, %s52
    %p64 = scmp.eq.s32.totalorder %s21, 1
    %p65 = por %p63, %p64
    %p67 = scmp.ne.s32.totalorder %s52, %s66
    %p68 = scmp.eq.s32.totalorder %s21, 0
    %p69 = por %p67, %p68
    %s71 = sadd.s32 %s70, 1
    %p74 = scmp.eq.s32.totalorder %s15, 1
    %p75 = scmp.ne.s32.totalorder %s70, %s72
    %p76 = scmp.eq.s32.totalorder %s15, 0
    %p77 = por %p75, %p76
    %p78 = scmp.ne.s32.totalorder %s70, %s72
    %p79 = scmp.eq.s32.totalorder %s20, 1
    %p80 = por %p78, %p79
    %p81 = scmp.ne.s32.totalorder %s72, %s73
    %p82 = scmp.eq.s32.totalorder %s20, 0
    %p83 = por %p81, %p82
    %p84 = scmp.ne.s32.totalorder %s72, %s73
    %p85 = scmp.eq.s32.totalorder %s21, 1
    %p86 = por %p84, %p85
    %p88 = scmp.ne.s32.totalorder %s73, %s87
    %p89 = scmp.eq.s32.totalorder %s21, 0
    %p90 = por %p88, %p89
    %s92 = sadd.s32 %s91, 1
    %p95 = scmp.eq.s32.totalorder %s15, 1
    %p96 = scmp.ne.s32.totalorder %s91, %s93
    %p97 = scmp.eq.s32.totalorder %s15, 0
    %p98 = por %p96, %p97
    %p99 = scmp.ne.s32.totalorder %s91, %s93
    %p100 = scmp.eq.s32.totalorder %s20, 1
    %p101 = por %p99, %p100
    %p102 = scmp.ne.s32.totalorder %s93, %s94
    %p103 = scmp.eq.s32.totalorder %s20, 0
    %p104 = por %p102, %p103
    %p105 = scmp.ne.s32.totalorder %s93, %s94
    %p106 = scmp.eq.s32.totalorder %s21, 1
    %p107 = por %p105, %p106
    %p109 = scmp.ne.s32.totalorder %s94, %s108
    %p110 = scmp.eq.s32.totalorder %s21, 0
    %p111 = por %p109, %p110
    %s113 = sadd.s32 %s112, 1
    %p116 = scmp.eq.s32.totalorder %s15, 1
    %p117 = scmp.ne.s32.totalorder %s112, %s114
    %p118 = scmp.eq.s32.totalorder %s15, 0
    %p119 = por %p117, %p118
    %p120 = scmp.ne.s32.totalorder %s112, %s114
    %p121 = scmp.eq.s32.totalorder %s20, 1
    %p122 = por %p120, %p121
    %p123 = scmp.ne.s32.totalorder %s114, %s115
    %p124 = scmp.eq.s32.totalorder %s20, 0
    %p125 = por %p123, %p124
    %p126 = scmp.ne.s32.totalorder %s114, %s115
    %p127 = scmp.eq.s32.totalorder %s21, 1
    %p128 = por %p126, %p127
    %p130 = scmp.ne.s32.totalorder %s115, %s129
    %p131 = scmp.eq.s32.totalorder %s21, 0
    %p132 = por %p130, %p131
    %s134 = sadd.s32 %s133, 1
    %p137 = scmp.eq.s32.totalorder %s15, 1
    %p138 = scmp.ne.s32.totalorder %s133, %s135
    %p139 = scmp.eq.s32.totalorder %s15, 0
    %p140 = por %p138, %p139
    %p141 = scmp.ne.s32.totalorder %s133, %s135
    %p142 = scmp.eq.s32.totalorder %s20, 1
    %p143 = por %p141, %p142
    %p144 = scmp.ne.s32.totalorder %s135, %s136
    %p145 = scmp.eq.s32.totalorder %s20, 0
    %p146 = por %p144, %p145
    %p147 = scmp.ne.s32.totalorder %s135, %s136
    %p148 = scmp.eq.s32.totalorder %s21, 1
    %p149 = por %p147, %p148
    %p151 = scmp.ne.s32.totalorder %s136, %s150
    %p152 = scmp.eq.s32.totalorder %s21, 0
    %p153 = por %p151, %p152
    %s155 = sadd.s32 %s154, 1
    %p158 = scmp.eq.s32.totalorder %s15, 1
    %p159 = scmp.ne.s32.totalorder %s154, %s156
    %p160 = scmp.eq.s32.totalorder %s15, 0
    %p161 = por %p159, %p160
    %p162 = scmp.ne.s32.totalorder %s154, %s156
    %p163 = scmp.eq.s32.totalorder %s20, 1
    %p164 = por %p162, %p163
    %p165 = scmp.ne.s32.totalorder %s156, %s157
    %p166 = scmp.eq.s32.totalorder %s20, 0
    %p167 = por %p165, %p166
    %p168 = scmp.ne.s32.totalorder %s156, %s157
    %p169 = scmp.eq.s32.totalorder %s21, 1
    %p170 = por %p168, %p169
    %p172 = scmp.ne.s32.totalorder %s157, %s171
    %p173 = scmp.eq.s32.totalorder %s21, 0
    %p174 = por %p172, %p173
    %s176 = sadd.s32 %s175, 1
    %p179 = scmp.eq.s32.totalorder %s15, 1
    %p180 = scmp.ne.s32.totalorder %s175, %s177
    %p181 = scmp.eq.s32.totalorder %s15, 0
    %p182 = por %p180, %p181
    %p183 = scmp.ne.s32.totalorder %s175, %s177
    %p184 = scmp.eq.s32.totalorder %s20, 1
    %p185 = por %p183, %p184
    %p186 = scmp.ne.s32.totalorder %s177, %s178
    %p187 = scmp.eq.s32.totalorder %s20, 0
    %p188 = por %p186, %p187
    %p189 = scmp.ne.s32.totalorder %s177, %s178
    %p190 = scmp.eq.s32.totalorder %s21, 1
    %p191 = por %p189, %p190
    %p193 = scmp.ne.s32.totalorder %s178, %s192
    %p194 = scmp.eq.s32.totalorder %s21, 0
    %p195 = por %p193, %p194
    %s197 = sadd.s32 %s196, 1
    %p200 = scmp.eq.s32.totalorder %s15, 1
    %p201 = scmp.ne.s32.totalorder %s196, %s198
    %p202 = scmp.eq.s32.totalorder %s15, 0
    %p203 = por %p201, %p202
    %p204 = scmp.ne.s32.totalorder %s196, %s198
    %p205 = scmp.eq.s32.totalorder %s20, 1
    %p206 = por %p204, %p205
    %p207 = scmp.ne.s32.totalorder %s198, %s199
    %p208 = scmp.eq.s32.totalorder %s20, 0
    %p209 = por %p207, %p208
    %p210 = scmp.ne.s32.totalorder %s198, %s199
    %p211 = scmp.eq.s32.totalorder %s21, 1
    %p212 = por %p210, %p211
    %p214 = scmp.ne.s32.totalorder %s199, %s213
    %p215 = scmp.eq.s32.totalorder %s21, 0
    %p216 = por %p214, %p215
    %s217 = ssub.s32 %s15, %s22
    %p218 = scmp.eq.s32.totalorder %s217, 0
    %s220 = sadd.s32 %s219, 1
    %s221 = scalar_select %p218, %s219, %s220
    %p224 = pneg %p218
    %p225 = scmp.eq.s32.totalorder %s15, 1
    %p226 = por %p224, %p225
    %p227 = scmp.ne.s32.totalorder %s219, %s222
    %p228 = scmp.eq.s32.totalorder %s15, 0
    %p229 = por %p227, %p228
    %p230 = scmp.ne.s32.totalorder %s219, %s222
    %p231 = scmp.eq.s32.totalorder %s20, 1
    %p232 = por %p230, %p231
    %p233 = scmp.ne.s32.totalorder %s222, %s223
    %p234 = scmp.eq.s32.totalorder %s20, 0
    %p235 = por %p233, %p234
    %p236 = scmp.ne.s32.totalorder %s222, %s223
    %p237 = scmp.eq.s32.totalorder %s21, 1
    %p238 = por %p236, %p237
    %p240 = scmp.ne.s32.totalorder %s223, %s239
    %p241 = scmp.eq.s32.totalorder %s21, 0
    %p242 = por %p240, %p241
    %p243 = scmp.le.s32.totalorder 1, %s15
    %p244 = scmp.lt.s32.totalorder %s15, 3
    %p245 = pnand %p243, %p244
    %p246 = pneg %p245
    // Predicated region
    $region9: #{wrapper_forward.1} parent=5 // pred_check
      _
    $region10: #{wrapper_forward.1} parent=5 // pred_check_branch
      %248 = sbr.rel (%p245) target = $region12
    $region11: #{wrapper_forward.1} parent=5 // pred_region
      %s249 = ssub.s32 %s15, 1
      // Predicated region
      $region13: #{wrapper_forward.1} parent=11 // pred_check
        %p250 = pneg %p62
      $region14: #{wrapper_forward.1} parent=11 // pred_check_branch
        %252 = sbr.rel (%p250) target = $region16
      $region15: #{wrapper_forward.1} parent=11 // pred_region
        _
      $region16: #{wrapper_forward.1} parent=11 // pred_fallthru
        _
      // Predicated region
      $region17: #{wrapper_forward.1} parent=11 // pred_check
        %p253 = pneg %p83
      $region18: #{wrapper_forward.1} parent=11 // pred_check_branch
        %255 = sbr.rel (%p253) target = $region20
      $region19: #{wrapper_forward.1} parent=11 // pred_region
        _
      $region20: #{wrapper_forward.1} parent=11 // pred_fallthru
        _
      // Predicated region
      $region21: #{wrapper_forward.1} parent=11 // pred_check
        %p256 = pneg %p104
      $region22: #{wrapper_forward.1} parent=11 // pred_check_branch
        %258 = sbr.rel (%p256) target = $region24
      $region23: #{wrapper_forward.1} parent=11 // pred_region
        _
      $region24: #{wrapper_forward.1} parent=11 // pred_fallthru
        _
      // Predicated region
      $region25: #{wrapper_forward.1} parent=11 // pred_check
        %p259 = pneg %p125
      $region26: #{wrapper_forward.1} parent=11 // pred_check_branch
        %261 = sbr.rel (%p259) target = $region28
      $region27: #{wrapper_forward.1} parent=11 // pred_region
        _
      $region28: #{wrapper_forward.1} parent=11 // pred_fallthru
        _
      // Predicated region
      $region29: #{wrapper_forward.1} parent=11 // pred_check
        %p262 = pneg %p146
      $region30: #{wrapper_forward.1} parent=11 // pred_check_branch
        %264 = sbr.rel (%p262) target = $region32
      $region31: #{wrapper_forward.1} parent=11 // pred_region
        _
      $region32: #{wrapper_forward.1} parent=11 // pred_fallthru
        _
      // Predicated region
      $region33: #{wrapper_forward.1} parent=11 // pred_check
        %p265 = pneg %p167
      $region34: #{wrapper_forward.1} parent=11 // pred_check_branch
        %267 = sbr.rel (%p265) target = $region36
      $region35: #{wrapper_forward.1} parent=11 // pred_region
        _
      $region36: #{wrapper_forward.1} parent=11 // pred_fallthru
        _
      // Predicated region
      $region37: #{wrapper_forward.1} parent=11 // pred_check
        %p268 = pneg %p188
      $region38: #{wrapper_forward.1} parent=11 // pred_check_branch
        %270 = sbr.rel (%p268) target = $region40
      $region39: #{wrapper_forward.1} parent=11 // pred_region
        _
      $region40: #{wrapper_forward.1} parent=11 // pred_fallthru
        _
      // Predicated region
      $region41: #{wrapper_forward.1} parent=11 // pred_check
        %p271 = pneg %p209
      $region42: #{wrapper_forward.1} parent=11 // pred_check_branch
        %273 = sbr.rel (%p271) target = $region44
      $region43: #{wrapper_forward.1} parent=11 // pred_region
        _
      $region44: #{wrapper_forward.1} parent=11 // pred_fallthru
        _
    $region12: #{wrapper_forward.1} parent=5 // pred_fallthru
      _
    %p274 = scmp.lt.s32.totalorder %s15, 2
    // Predicated region
    $region45: #{wrapper_forward.1} parent=5 // pred_check
      %p275 = pneg %p274
    $region46: #{wrapper_forward.1} parent=5 // pred_check_branch
      %277 = sbr.rel (%p275) target = $region48
    $region47: #{wrapper_forward.1} parent=5 // pred_region
      // Predicated region
      $region49: #{wrapper_forward.1} parent=47 // pred_check
        %p278 = pneg %p35
      $region50: #{wrapper_forward.1} parent=47 // pred_check_branch
        %280 = sbr.rel (%p278) target = $region52
      $region51: #{wrapper_forward.1} parent=47 // pred_region
        %p281 = scmp.lt.s32.totalorder %s15, 1
        %s282 = scalar_select %p281, %s15, 1
        %s283 = smul.addr %s282, 8
        %s284 = smul.addr %s283, 8
        %s285 = scalar_lea.vmem %s0, %s284
      $region52: #{wrapper_forward.1} parent=47 // pred_fallthru
        _
    $region48: #{wrapper_forward.1} parent=5 // pred_fallthru
      _
    %p286 = scmp.le.s32.totalorder 1, %s15
    %p287 = scmp.lt.s32.totalorder %s15, 3
    %p288 = pnand %p286, %p287
    %p289 = pneg %p288
    // Predicated region
    $region53: #{wrapper_forward.1} parent=5 // pred_check
      _
    $region54: #{wrapper_forward.1} parent=5 // pred_check_branch
      %291 = sbr.rel (%p288) target = $region56
    $region55: #{wrapper_forward.1} parent=5 // pred_region
      %s292 = ssub.s32 %s15, 1
      %p293 = scmp.lt.s32.totalorder %s20, 1
      %s294 = scalar_select %p293, %s20, 1
      %s295 = smul.addr %s294, 8
      %s296 = smul.addr %s295, 8
      %s297 = scalar_lea.vmem %s0, %s296
      %p298 = pneg %p41
      %p299 = pneg %p38
      %p300 = pneg %p62
      %p301 = pneg %p59
      %p302 = pneg %p83
      %p303 = pneg %p80
      %p304 = pneg %p104
      %p305 = pneg %p101
      %p306 = pneg %p125
      %p307 = pneg %p122
      %p308 = pneg %p146
      %p309 = pneg %p143
      %p310 = pneg %p167
      %p311 = pneg %p164
      %p312 = pneg %p188
      %p313 = pneg %p185
      %p314 = pneg %p209
      %p315 = pneg %p206
      %p316 = pneg %p235
      %p317 = pneg %p232
      %p318 = scmp.lt.s32.totalorder %s20, 1
      %s319 = scalar_select %p318, %s20, 1
      %s320 = scalar_lea.vmem %s9, %s319
      %p321 = scmp.lt.s32.totalorder %s20, 1
      %s322 = scalar_select %p321, %s20, 1
      %s323 = smul.addr %s322, 8
      %s324 = smul.addr %s323, 8
      %s325 = scalar_lea.vmem %s0, %s324
      %p326 = scmp.lt.s32.totalorder %s20, 1
      %s327 = scalar_select %p326, %s20, 1
      %s328 = scalar_lea.vmem %s9, %s327
      %v329 = vld [vmem:[%s325] sm:$0xff]
      %v330 = vld [vmem:[%s325 + $0x8] sm:$0xff]
      %v331 = vld [vmem:[%s325 + $0x10] sm:$0xff]
      %v332 = vld [vmem:[%s325 + $0x18] sm:$0xff]
      %v333 = vld [vmem:[%s325 + $0x20] sm:$0xff]
      %v334 = vld [vmem:[%s325 + $0x28] sm:$0xff]
      %v335 = vld [vmem:[%s325 + $0x30] sm:$0xff]
      %v336 = vld [vmem:[%s325 + $0x38] sm:$0xff]
      %v337 = vld [vmem:[%s1] sm:$0xff]
      %v338 = vld [vmem:[%s1 + $0x8] sm:$0xff]
      %v339 = vld [vmem:[%s1 + $0x10] sm:$0xff]
      %v340 = vld [vmem:[%s1 + $0x18] sm:$0x7]
      %vm341 = vcmask 220160
      %v343 = vsel %vm341, %v329, 0
      %v346 = vsel %vm341, %v330, 0
      %v349 = vsel %vm341, %v331, 0
      %v352 = vsel %vm341, %v332, 0
      %v355 = vsel %vm341, %v333, 0
      %v358 = vsel %vm341, %v334, 0
      %v361 = vsel %vm341, %v335, 0
      %v364 = vsel %vm341, %v336, 0
      %vm366 = vcmask 1042432
      %v368 = vsel %vm366, %v340, 0
      %370 = vmatprep.subr.mxu0 0.0
      %371 = vmatpush1.msra.mxu0 %v337
      %372 = vmatprep.subr.mxu0 0.0
      %373 = vmatpush1.msra.mxu0 %v338
      %374 = vmatprep.subr.mxu0 0.0
      %375 = vmatpush1.msra.mxu0 %v339
      %376 = vmatprep.subr.mxu0 0.0
      %377 = vmatpush1.msra.mxu0 %v368
      %378 = vmatprep.subr.mxu0 0.0
      %379 = vmatpush1.msra.mxu0 0.0
      %380 = vmatprep.subr.mxu0 0.0
      %381 = vmatpush1.msra.mxu0 0.0
      %382 = vmatprep.subr.mxu0 0.0
      %383 = vmatpush1.msra.mxu0 0.0
      %384 = vmatprep.subr.mxu0 0.0
      %385 = vmatpush1.msra.mxu0 0.0
      %386 = vmatprep.subr.mxu0 0.0
      %387 = vmatpush1.msra.mxu0 0.0
      %388 = vmatprep.subr.mxu0 0.0
      %389 = vmatpush1.msra.mxu0 0.0
      %390 = vmatprep.subr.mxu0 0.0
      %391 = vmatpush1.msra.mxu0 0.0
      %392 = vmatprep.subr.mxu0 0.0
      %393 = vmatpush1.msra.mxu0 0.0
      %394 = vmatprep.subr.mxu0 0.0
      %395 = vmatpush1.msra.mxu0 0.0
      %396 = vmatprep.subr.mxu0 0.0
      %397 = vmatpush1.msra.mxu0 0.0
      %398 = vmatprep.subr.mxu0 0.0
      %399 = vmatpush1.msra.mxu0 0.0
      %400 = vmatprep.subr.mxu0 0.0
      %401 = vmatpush1.msra.mxu0 0.0
      %402 = vmatprep.subr.mxu0 0.0
      %403 = vmatpush1.msra.mxu0 0.0
      %404 = vmatprep.subr.mxu0 0.0
      %405 = vmatpush1.msra.mxu0 0.0
      %406 = vmatprep.subr.mxu0 0.0
      %407 = vmatpush1.msra.mxu0 0.0
      %408 = vmatprep.subr.mxu0 0.0
      %409 = vmatpush1.msra.mxu0 0.0
      %410 = vmatprep.subr.mxu0 0.0
      %411 = vmatpush1.msra.mxu0 0.0
      %412 = vmatprep.subr.mxu0 0.0
      %413 = vmatpush1.msra.mxu0 0.0
      %414 = vmatprep.subr.mxu0 0.0
      %415 = vmatpush1.msra.mxu0 0.0
      %416 = vmatprep.subr.mxu0 0.0
      %417 = vmatpush1.msra.mxu0 0.0
      %418 = vmatprep.subr.mxu0 0.0
      %419 = vmatpush1.msra.mxu0 0.0
      %420 = vmatprep.subr.mxu0 0.0
      %421 = vmatpush1.msra.mxu0 0.0
      %422 = vmatprep.subr.mxu0 0.0
      %423 = vmatpush1.msra.mxu0 0.0
      %424 = vmatprep.subr.mxu0 0.0
      %425 = vmatpush1.msra.mxu0 0.0
      %426 = vmatprep.subr.mxu0 0.0
      %427 = vmatpush1.msra.mxu0 0.0
      %428 = vmatprep.subr.mxu0 0.0
      %429 = vmatpush1.msra.mxu0 0.0
      %430 = vmatprep.subr.mxu0 0.0
      %431 = vmatpush1.msra.mxu0 0.0
      %432 = vmatprep.subr.mxu0 0.0
      %433 = vmatpush1.msra.mxu0 0.0
      %434 = vmatprep.mubr.f32.mxu0 0.0
      %435 = vmatmul.mubr.f32.gmra.mrb[0].mxu0 %v343
      %v436 = vpop.f32.mrb[0].mxu0
      %v437 = vadd.f32 0.0, %v436
      %v438 = vpop.f32.mrb[0].mxu0
      %439 = vmatprep.mubr.f32.mxu0 0.0
      %440 = vmatmul.mubr.f32.gmra.mrb[0].mxu0 %v346
      %v441 = vpop.f32.mrb[0].mxu0
      %v442 = vadd.f32 0.0, %v441
      %v443 = vpop.f32.mrb[0].mxu0
      %444 = vmatprep.mubr.f32.mxu0 0.0
      %445 = vmatmul.mubr.f32.gmra.mrb[0].mxu0 %v349
      %v446 = vpop.f32.mrb[0].mxu0
      %v447 = vadd.f32 0.0, %v446
      %v448 = vpop.f32.mrb[0].mxu0
      %449 = vmatprep.mubr.f32.mxu0 0.0
      %450 = vmatmul.mubr.f32.gmra.mrb[0].mxu0 %v352
      %v451 = vpop.f32.mrb[0].mxu0
      %v452 = vadd.f32 0.0, %v451
      %v453 = vpop.f32.mrb[0].mxu0
      %454 = vmatprep.mubr.f32.mxu0 0.0
      %455 = vmatmul.mubr.f32.gmra.mrb[0].mxu0 %v355
      %v456 = vpop.f32.mrb[0].mxu0
      %v457 = vadd.f32 0.0, %v456
      %v458 = vpop.f32.mrb[0].mxu0
      %459 = vmatprep.mubr.f32.mxu0 0.0
      %460 = vmatmul.mubr.f32.gmra.mrb[0].mxu0 %v358
      %v461 = vpop.f32.mrb[0].mxu0
      %v462 = vadd.f32 0.0, %v461
      %v463 = vpop.f32.mrb[0].mxu0
      %464 = vmatprep.mubr.f32.mxu0 0.0
      %465 = vmatmul.mubr.f32.gmra.mrb[0].mxu0 %v361
      %v466 = vpop.f32.mrb[0].mxu0
      %v467 = vadd.f32 0.0, %v466
      %v468 = vpop.f32.mrb[0].mxu0
      %469 = vmatprep.mubr.f32.mxu0 0.0
      %470 = vmatmul.mubr.f32.gmra.mrb[0].mxu0 %v364
      %v471 = vpop.f32.mrb[0].mxu0
      %v472 = vadd.f32 0.0, %v471
      %v473 = vpop.f32.mrb[0].mxu0
      %474 = vdwg.mxu0
      %v475 = vmax.f32 %v437, %v447
      %v476 = vmax.f32 %v442, %v452
      %v477 = vmax.f32 %v457, %v467
      %v478 = vmax.f32 %v462, %v472
      %v479 = vmax.f32 %v475, %v477
      %v480 = vmax.f32 %v476, %v478
      %v481 = vld [vmem:[%s2] sm:$0x1]
      %v483 = vlaneseq
      %v484 = vshrl.u32 %v483, 7
      %v485 = vsub.s32 0, %v484
      %v486 = vrot.slane %v481, %v485
      %v488 = vadd.f32 %v479, %v486
      %v489 = vadd.f32 %v480, %v486
      %v490 = vmax.f32 %v488, 0.0
      %v491 = vmax.f32 %v489, 0.0
      %v493 = vrot.slane %v490, 7
      %v496 = vrot.slane %v491, 7
      %vm498 = vcmask 1040384
      %v499 = vsel %vm498, 0.0, %v493
      %vm500 = vcmask 1043456
      %v501 = vsel %vm500, %v499, 0.0
      %vm502 = vcmask 1044480
      %v503 = vsel %vm502, %v501, %v493
      %v504 = vsel %vm498, 0.0, %v496
      %v505 = vsel %vm500, %v504, 0.0
      %v506 = vsel %vm502, %v505, %v496
      %v507 = vrot.slane %v490, 1
      %v509 = vrot.slane %v491, 1
      %v511 = vsel %vm366, %v507, 0.0
      %v512 = vsel %vm500, %v511, %v507
      %vm513 = vcmask 1046528
      %v514 = vsel %vm513, %v512, 0.0
      %v515 = vsel %vm366, %v509, 0.0
      %v516 = vsel %vm500, %v515, %v509
      %v517 = vsel %vm513, %v516, 0.0
      %v520 = vrot.slane %v503, 4
      %v521 = vrot.slane %v506, 4
      %v522 = vsel %vm500, %v520, %v521
      %v525 = vsel %vm500, 0.0, %v520
      %v526 = vrot.slane %v490, 4
      %v527 = vrot.slane %v491, 4
      %v528 = vsel %vm500, %v526, %v527
      %v530 = vsel %vm500, 0.0, %v526
      %v533 = vrot.slane %v514, 4
      %v534 = vrot.slane %v517, 4
      %v535 = vsel %vm500, %v533, %v534
      %v537 = vsel %vm500, 0.0, %v533
      %v539 = vsel %vm500, %v521, 0.0
      %v541 = vsel %vm500, %v527, 0.0
      %v543 = vsel %vm500, %v534, 0.0
      %545 = vrot.lane.b32.xlu0 %v530, 16
      %v546 = vpop.permute.xlu0 %545
      %547 = vrot.lane.b32.xlu0 %v528, 16
      %v548 = vpop.permute.xlu0 %547
      %552 = vrot.lane.b32.xlu0 %v537, 32
      %v553 = vpop.permute.xlu0 %552
      %554 = vrot.lane.b32.xlu0 %v535, 32
      %v555 = vpop.permute.xlu0 %554
      %558 = vrot.lane.b32.xlu0 %v503, 48
      %v559 = vpop.permute.xlu0 %558
      %560 = vrot.lane.b32.xlu0 %v506, 48
      %v561 = vpop.permute.xlu0 %560
      %564 = vrot.lane.b32.xlu0 %v490, 64
      %v565 = vpop.permute.xlu0 %564
      %566 = vrot.lane.b32.xlu0 %v491, 64
      %v567 = vpop.permute.xlu0 %566
      %570 = vrot.lane.b32.xlu0 %v514, 80
      %v571 = vpop.permute.xlu0 %570
      %572 = vrot.lane.b32.xlu0 %v517, 80
      %v573 = vpop.permute.xlu0 %572
      %577 = vrot.lane.b32.xlu0 %v522, 96
      %v578 = vpop.permute.xlu0 %577
      %579 = vrot.lane.b32.xlu0 %v539, 96
      %v580 = vpop.permute.xlu0 %579
      %584 = vrot.lane.b32.xlu0 %v528, 112
      %v585 = vpop.permute.xlu0 %584
      %586 = vrot.lane.b32.xlu0 %v541, 112
      %v587 = vpop.permute.xlu0 %586
      %vm590 = vcmask 130048
      %v591 = vsel %vm590, %v525, %v546
      %v592 = vsel %vm590, %v522, %v548
      %vm593 = vcmask 261120
      %v594 = vsel %vm593, %v591, %v553
      %v595 = vsel %vm593, %v592, %v555
      %vm596 = vcmask 392192
      %v597 = vsel %vm596, %v594, %v559
      %v598 = vsel %vm596, %v595, %v561
      %vm599 = vcmask 523264
      %v600 = vsel %vm599, %v597, %v565
      %v601 = vsel %vm599, %v598, %v567
      %vm602 = vcmask 654336
      %v603 = vsel %vm602, %v600, %v571
      %v604 = vsel %vm602, %v601, %v573
      %vm605 = vcmask 785408
      %v606 = vsel %vm605, %v603, %v578
      %v607 = vsel %vm605, %v604, %v580
      %vm608 = vcmask 916480
      %v609 = vsel %vm608, %v606, %v585
      %v610 = vsel %vm608, %v607, %v587
      %v611 = vld [vmem:[%s3] sm:$0xff]
      %v612 = vld [vmem:[%s3 + $0x8] sm:$0xff]
      %v613 = vld [vmem:[%s3 + $0x10] sm:$0xff]
      %v614 = vld [vmem:[%s3 + $0x18] sm:$0xff]
      %v615 = vld [vmem:[%s3 + $0x20] sm:$0xff]
      %v616 = vld [vmem:[%s3 + $0x28] sm:$0xff]
      %v617 = vld [vmem:[%s3 + $0x30] sm:$0xff]
      %v618 = vld [vmem:[%s3 + $0x38] sm:$0xff]
      %v619 = vld [vmem:[%s3 + $0x40] sm:$0xff]
      %v620 = vld [vmem:[%s3 + $0x48] sm:$0xff]
      %v621 = vld [vmem:[%s3 + $0x50] sm:$0xff]
      %v622 = vld [vmem:[%s3 + $0x58] sm:$0xff]
      %v623 = vld [vmem:[%s3 + $0x60] sm:$0xff]
      %v624 = vld [vmem:[%s3 + $0x68] sm:$0xff]
      %v625 = vld [vmem:[%s3 + $0x70] sm:$0xff]
      %v626 = vld [vmem:[%s3 + $0x78] sm:$0xff]
      %v627 = vld [vmem:[%s3 + $0x80] sm:$0xff]
      %v628 = vld [vmem:[%s3 + $0x88] sm:$0xff]
      %v629 = vld [vmem:[%s4] sm:$0x1]
      %v631 = vlaneseq
      %v632 = vshrl.u32 %v631, 7
      %v633 = vsub.s32 0, %v632
      %v634 = vrot.slane %v629, %v633
      %v636 = vsel %vm590, %v535, 0
      %v639 = vsel %vm590, %v543, 0
      %641 = vmatprep.subr.mxu0 0.0
      %642 = vmatpush1.msra.mxu0 %v611
      %643 = vmatprep.subr.mxu0 0.0
      %644 = vmatpush1.msra.mxu0 %v612
      %645 = vmatprep.subr.mxu0 0.0
      %646 = vmatpush1.msra.mxu0 %v613
      %647 = vmatprep.subr.mxu0 0.0
      %648 = vmatpush1.msra.mxu0 %v614
      %649 = vmatprep.subr.mxu0 0.0
      %650 = vmatpush1.msra.mxu0 %v615
      %651 = vmatprep.subr.mxu0 0.0
      %652 = vmatpush1.msra.mxu0 %v616
      %653 = vmatprep.subr.mxu0 0.0
      %654 = vmatpush1.msra.mxu0 %v617
      %655 = vmatprep.subr.mxu0 0.0
      %656 = vmatpush1.msra.mxu0 %v618
      %657 = vmatprep.subr.mxu0 0.0
      %658 = vmatpush1.msra.mxu0 %v619
      %659 = vmatprep.subr.mxu0 0.0
      %660 = vmatpush1.msra.mxu0 %v620
      %661 = vmatprep.subr.mxu0 0.0
      %662 = vmatpush1.msra.mxu0 %v621
      %663 = vmatprep.subr.mxu0 0.0
      %664 = vmatpush1.msra.mxu0 %v622
      %665 = vmatprep.subr.mxu0 0.0
      %666 = vmatpush1.msra.mxu0 %v623
      %667 = vmatprep.subr.mxu0 0.0
      %668 = vmatpush1.msra.mxu0 %v624
      %669 = vmatprep.subr.mxu0 0.0
      %670 = vmatpush1.msra.mxu0 %v625
      %671 = vmatprep.subr.mxu0 0.0
      %672 = vmatpush1.msra.mxu0 %v626
      %673 = vmatprep.subr.mxu0 0.0
      %674 = vmatpush1.msra.mxu0 %v627
      %675 = vmatprep.subr.mxu0 0.0
      %676 = vmatpush1.msra.mxu0 %v628
      %677 = vmatprep.subr.mxu0 0.0
      %678 = vmatpush1.msra.mxu0 0.0
      %679 = vmatprep.subr.mxu0 0.0
      %680 = vmatpush1.msra.mxu0 0.0
      %681 = vmatprep.subr.mxu0 0.0
      %682 = vmatpush1.msra.mxu0 0.0
      %683 = vmatprep.subr.mxu0 0.0
      %684 = vmatpush1.msra.mxu0 0.0
      %685 = vmatprep.subr.mxu0 0.0
      %686 = vmatpush1.msra.mxu0 0.0
      %687 = vmatprep.subr.mxu0 0.0
      %688 = vmatpush1.msra.mxu0 0.0
      %689 = vmatprep.subr.mxu0 0.0
      %690 = vmatpush1.msra.mxu0 0.0
      %691 = vmatprep.subr.mxu0 0.0
      %692 = vmatpush1.msra.mxu0 0.0
      %693 = vmatprep.subr.mxu0 0.0
      %694 = vmatpush1.msra.mxu0 0.0
      %695 = vmatprep.subr.mxu0 0.0
      %696 = vmatpush1.msra.mxu0 0.0
      %697 = vmatprep.subr.mxu0 0.0
      %698 = vmatpush1.msra.mxu0 0.0
      %699 = vmatprep.subr.mxu0 0.0
      %700 = vmatpush1.msra.mxu0 0.0
      %701 = vmatprep.subr.mxu0 0.0
      %702 = vmatpush1.msra.mxu0 0.0
      %703 = vmatprep.subr.mxu0 0.0
      %704 = vmatpush1.msra.mxu0 0.0
      %705 = vmatprep.mubr.f32.mxu0 %v636
      %706 = vmatmul.mubr.f32.gmra.mrb[0].mxu0 %v609
      %v707 = vpop.f32.mrb[0].mxu0
      %v708 = vadd.f32 %v634, %v707
      %v709 = vpop.f32.mrb[0].mxu0
      %710 = vmatprep.mubr.f32.mxu0 %v639
      %711 = vmatmul.mubr.f32.gmra.mrb[0].mxu0 %v610
      %v712 = vpop.f32.mrb[0].mxu0
      %v713 = vadd.f32 %v634, %v712
      %v714 = vpop.f32.mrb[0].mxu0
      %715 = vdwg.mxu0
      %v716 = vmax.f32 %v708, 0.0
      %v717 = vmax.f32 %v713, 0.0
      %v719 = vrot.slane %v716, 1
      %v721 = vmax.f32 %v716, %v719
      %v723 = vrot.slane %v721, 4
      %v725 = vmax.f32 %v721, %v723
      %v727 = vrot.slane %v717, 1
      %v729 = vmax.f32 %v717, %v727
      %v731 = vrot.slane %v729, 4
      %v733 = vmax.f32 %v729, %v731
      %v735 = vrot.slane %v725, 2
      %736 = vrot.lane.b32.xlu0 %v735, 32
      %v737 = vpop.permute.xlu0 %736
      %740 = vrot.lane.b32.xlu0 %v733, 64
      %v741 = vpop.permute.xlu0 %740
      %v743 = vrot.slane %v733, 2
      %744 = vrot.lane.b32.xlu0 %v743, 96
      %v745 = vpop.permute.xlu0 %744
      %v747 = vsel %vm593, %v725, %v737
      %v748 = vsel %vm599, %v747, %v741
      %v749 = vsel %vm605, %v748, %v745
      %v750 = vld [vmem:[%s5] sm:$0xff]
      %v751 = vld [vmem:[%s5 + $0x8] sm:$0xff]
      %v752 = vld [vmem:[%s5 + $0x10] sm:$0xff]
      %v753 = vld [vmem:[%s5 + $0x18] sm:$0xff]
      %v754 = vld [vmem:[%s5 + $0x20] sm:$0xff]
      %v755 = vld [vmem:[%s5 + $0x28] sm:$0xff]
      %v756 = vld [vmem:[%s5 + $0x30] sm:$0xff]
      %v757 = vld [vmem:[%s5 + $0x38] sm:$0xff]
      %v758 = vld [vmem:[%s5 + $0x40] sm:$0xff]
      %v759 = vld [vmem:[%s5 + $0x48] sm:$0xff]
      %v760 = vld [vmem:[%s5 + $0x50] sm:$0xff]
      %v761 = vld [vmem:[%s5 + $0x58] sm:$0xff]
      %v762 = vld [vmem:[%s5 + $0x60] sm:$0xff]
      %v763 = vld [vmem:[%s5 + $0x68] sm:$0xff]
      %v764 = vld [vmem:[%s5 + $0x70] sm:$0xff]
      %v765 = vld [vmem:[%s5 + $0x78] sm:$0xff]
      %v766 = vld [vmem:[%s6] sm:$0x1]
      %767 = vmatprep.subr.mxu0 0.0
      %768 = vmatpush1.msra.mxu0 %v750
      %769 = vmatprep.subr.mxu0 0.0
      %770 = vmatpush1.msra.mxu0 %v751
      %771 = vmatprep.subr.mxu0 0.0
      %772 = vmatpush1.msra.mxu0 %v752
      %773 = vmatprep.subr.mxu0 0.0
      %774 = vmatpush1.msra.mxu0 %v753
      %775 = vmatprep.subr.mxu0 0.0
      %776 = vmatpush1.msra.mxu0 %v754
      %777 = vmatprep.subr.mxu0 0.0
      %778 = vmatpush1.msra.mxu0 %v755
      %779 = vmatprep.subr.mxu0 0.0
      %780 = vmatpush1.msra.mxu0 %v756
      %781 = vmatprep.subr.mxu0 0.0
      %782 = vmatpush1.msra.mxu0 %v757
      %783 = vmatprep.subr.mxu0 0.0
      %784 = vmatpush1.msra.mxu0 %v758
      %785 = vmatprep.subr.mxu0 0.0
      %786 = vmatpush1.msra.mxu0 %v759
      %787 = vmatprep.subr.mxu0 0.0
      %788 = vmatpush1.msra.mxu0 %v760
      %789 = vmatprep.subr.mxu0 0.0
      %790 = vmatpush1.msra.mxu0 %v761
      %791 = vmatprep.subr.mxu0 0.0
      %792 = vmatpush1.msra.mxu0 %v762
      %793 = vmatprep.subr.mxu0 0.0
      %794 = vmatpush1.msra.mxu0 %v763
      %795 = vmatprep.subr.mxu0 0.0
      %796 = vmatpush1.msra.mxu0 %v764
      %797 = vmatprep.subr.mxu0 0.0
      %798 = vmatpush1.msra.mxu0 %v765
      %799 = vmatprep.subr.mxu0 0.0
      %800 = vmatpush1.msra.mxu0 0.0
      %801 = vmatprep.subr.mxu0 0.0
      %802 = vmatpush1.msra.mxu0 0.0
      %803 = vmatprep.subr.mxu0 0.0
      %804 = vmatpush1.msra.mxu0 0.0
      %805 = vmatprep.subr.mxu0 0.0
      %806 = vmatpush1.msra.mxu0 0.0
      %807 = vmatprep.subr.mxu0 0.0
      %808 = vmatpush1.msra.mxu0 0.0
      %809 = vmatprep.subr.mxu0 0.0
      %810 = vmatpush1.msra.mxu0 0.0
      %811 = vmatprep.subr.mxu0 0.0
      %812 = vmatpush1.msra.mxu0 0.0
      %813 = vmatprep.subr.mxu0 0.0
      %814 = vmatpush1.msra.mxu0 0.0
      %815 = vmatprep.subr.mxu0 0.0
      %816 = vmatpush1.msra.mxu0 0.0
      %817 = vmatprep.subr.mxu0 0.0
      %818 = vmatpush1.msra.mxu0 0.0
      %819 = vmatprep.subr.mxu0 0.0
      %820 = vmatpush1.msra.mxu0 0.0
      %821 = vmatprep.subr.mxu0 0.0
      %822 = vmatpush1.msra.mxu0 0.0
      %823 = vmatprep.subr.mxu0 0.0
      %824 = vmatpush1.msra.mxu0 0.0
      %825 = vmatprep.subr.mxu0 0.0
      %826 = vmatpush1.msra.mxu0 0.0
      %827 = vmatprep.subr.mxu0 0.0
      %828 = vmatpush1.msra.mxu0 0.0
      %829 = vmatprep.subr.mxu0 0.0
      %830 = vmatpush1.msra.mxu0 0.0
      %831 = vmatprep.mubr.f32.mxu0 0.0
      %832 = vmatmul.mubr.f32.gmra.mrb[0].mxu0 %v749
      %v833 = vpop.f32.mrb[0].mxu0
      %v834 = vadd.f32 %v766, %v833
      %v835 = vpop.f32.mrb[0].mxu0
      %836 = vdwg.mxu0
      %v837 = vmax.f32 %v834, 0.0
      %v838 = vld [vmem:[%s7] sm:$0xff]
      %v839 = vld [vmem:[%s7 + $0x8] sm:$0xff]
      %v840 = vld [vmem:[%s7 + $0x10] sm:$0xff]
      %v841 = vld [vmem:[%s7 + $0x18] sm:$0xff]
      %v842 = vld [vmem:[%s7 + $0x20] sm:$0xff]
      %v843 = vld [vmem:[%s7 + $0x28] sm:$0xff]
      %v844 = vld [vmem:[%s7 + $0x30] sm:$0xff]
      %v845 = vld [vmem:[%s7 + $0x38] sm:$0xff]
      %v846 = vld [vmem:[%s8] sm:$0x1]
      %v848 = vsel %vm599, %v837, 0
      %850 = vmatprep.subr.mxu0 0.0
      %851 = vmatpush1.msra.mxu0 %v838
      %852 = vmatprep.subr.mxu0 0.0
      %853 = vmatpush1.msra.mxu0 %v839
      %854 = vmatprep.subr.mxu0 0.0
      %855 = vmatpush1.msra.mxu0 %v840
      %856 = vmatprep.subr.mxu0 0.0
      %857 = vmatpush1.msra.mxu0 %v841
      %858 = vmatprep.subr.mxu0 0.0
      %859 = vmatpush1.msra.mxu0 %v842
      %860 = vmatprep.subr.mxu0 0.0
      %861 = vmatpush1.msra.mxu0 %v843
      %862 = vmatprep.subr.mxu0 0.0
      %863 = vmatpush1.msra.mxu0 %v844
      %864 = vmatprep.subr.mxu0 0.0
      %865 = vmatpush1.msra.mxu0 %v845
      %866 = vmatprep.subr.mxu0 0.0
      %867 = vmatpush1.msra.mxu0 0.0
      %868 = vmatprep.subr.mxu0 0.0
      %869 = vmatpush1.msra.mxu0 0.0
      %870 = vmatprep.subr.mxu0 0.0
      %871 = vmatpush1.msra.mxu0 0.0
      %872 = vmatprep.subr.mxu0 0.0
      %873 = vmatpush1.msra.mxu0 0.0
      %874 = vmatprep.subr.mxu0 0.0
      %875 = vmatpush1.msra.mxu0 0.0
      %876 = vmatprep.subr.mxu0 0.0
      %877 = vmatpush1.msra.mxu0 0.0
      %878 = vmatprep.subr.mxu0 0.0
      %879 = vmatpush1.msra.mxu0 0.0
      %880 = vmatprep.subr.mxu0 0.0
      %881 = vmatpush1.msra.mxu0 0.0
      %882 = vmatprep.subr.mxu0 0.0
      %883 = vmatpush1.msra.mxu0 0.0
      %884 = vmatprep.subr.mxu0 0.0
      %885 = vmatpush1.msra.mxu0 0.0
      %886 = vmatprep.subr.mxu0 0.0
      %887 = vmatpush1.msra.mxu0 0.0
      %888 = vmatprep.subr.mxu0 0.0
      %889 = vmatpush1.msra.mxu0 0.0
      %890 = vmatprep.subr.mxu0 0.0
      %891 = vmatpush1.msra.mxu0 0.0
      %892 = vmatprep.subr.mxu0 0.0
      %893 = vmatpush1.msra.mxu0 0.0
      %894 = vmatprep.subr.mxu0 0.0
      %895 = vmatpush1.msra.mxu0 0.0
      %896 = vmatprep.subr.mxu0 0.0
      %897 = vmatpush1.msra.mxu0 0.0
      %898 = vmatprep.subr.mxu0 0.0
      %899 = vmatpush1.msra.mxu0 0.0
      %900 = vmatprep.subr.mxu0 0.0
      %901 = vmatpush1.msra.mxu0 0.0
      %902 = vmatprep.subr.mxu0 0.0
      %903 = vmatpush1.msra.mxu0 0.0
      %904 = vmatprep.subr.mxu0 0.0
      %905 = vmatpush1.msra.mxu0 0.0
      %906 = vmatprep.subr.mxu0 0.0
      %907 = vmatpush1.msra.mxu0 0.0
      %908 = vmatprep.subr.mxu0 0.0
      %909 = vmatpush1.msra.mxu0 0.0
      %910 = vmatprep.subr.mxu0 0.0
      %911 = vmatpush1.msra.mxu0 0.0
      %912 = vmatprep.subr.mxu0 0.0
      %913 = vmatpush1.msra.mxu0 0.0
      %914 = vmatprep.mubr.f32.mxu0 0.0
      %915 = vmatmul.mubr.f32.gmra.mrb[0].mxu0 %v848
      %v916 = vpop.f32.mrb[0].mxu0
      %v917 = vadd.f32 %v846, %v916
      %v918 = vpop.f32.mrb[0].mxu0
      %919 = vdwg.mxu0
      %921 = vrot.lane.b32.xlu0 %v917, 64
      %v922 = vpop.permute.xlu0 %921
      %v924 = vsel %vm599, %v837, %v922
      %vm925 = vcmask 949248
      %v926 = vsel %vm925, %v924, 0.0
      %927 = vst [vmem:[%s328] sm:$0x1] %v926
      %p928 = scmp.lt.s32.totalorder %s20, 1
      %s929 = scalar_select %p928, %s20, 1
      %s930 = scalar_lea.vmem %s9, %s929
      // Predicated region
      $region57: #{wrapper_forward.1} parent=55 // pred_check
        %p931 = pneg %p232
      $region58: #{wrapper_forward.1} parent=55 // pred_check_branch
        %933 = sbr.rel (%p931) target = $region60
      $region59: #{wrapper_forward.1} parent=55 // pred_region
        _
      $region60: #{wrapper_forward.1} parent=55 // pred_fallthru
        _
    $region56: #{wrapper_forward.1} parent=5 // pred_fallthru
      _
    %p934 = scmp.le.s32.totalorder 2, %s15
    // Predicated region
    $region61: #{wrapper_forward.1} parent=5 // pred_check
      %p935 = pneg %p934
    $region62: #{wrapper_forward.1} parent=5 // pred_check_branch
      %937 = sbr.rel (%p935) target = $region64
    $region63: #{wrapper_forward.1} parent=5 // pred_region
      %s938 = ssub.s32 %s15, 2
      // Predicated region
      $region65: #{wrapper_forward.1} parent=63 // pred_check
        %p939 = pneg %p238
      $region66: #{wrapper_forward.1} parent=63 // pred_check_branch
        %941 = sbr.rel (%p939) target = $region68
      $region67: #{wrapper_forward.1} parent=63 // pred_region
        %p942 = scmp.lt.s32.totalorder %s21, 1
        %s943 = scalar_select %p942, %s21, 1
        %s944 = scalar_lea.vmem %s9, %s943
      $region68: #{wrapper_forward.1} parent=63 // pred_fallthru
        _
    $region64: #{wrapper_forward.1} parent=5 // pred_fallthru
      _
  $region6: #{wrapper_forward.1} parent=0 // loop_footer
    %s19 = sadd.s32 1, %s15
  $region7: #{wrapper_forward.1} parent=0 // loop_footer_branch
    %14 = sbr.rel target = $region3
  $region8: #{wrapper_forward.1} parent=0 // loop_exit
    _

</llo_original>
